<compile_context>
chip_gen: v7x
topology: tpu7x:2x2x1
jax: 0.10.0
libtpu: 0.0.40
codegen_flags: <defaults>
</compile_context>

<pallas_src>
import jax
import jax.numpy as jnp
from jax.experimental import pallas as pl
from jax.experimental.pallas import tpu as pltpu


def _round_up(x, m):
    return (x + m - 1) // m * m


def _cdiv(a, b):
    return (a + b - 1) // b


def _patch_embed_kernel(x_ref, w_ref, b_ref, o_ref):
    # x_ref: (tm, K_pad) bf16   w_ref: (K_pad, tn) bf16   b_ref: (1, tn) f32
    # o_ref: (tm, tn).  MXU matmul with f32 accumulation; bias added in f32.
    acc = jnp.dot(x_ref[...], w_ref[...], preferred_element_type=jnp.float32)
    o_ref[...] = (acc + b_ref[...]).astype(o_ref.dtype)


def patch_embed_forward(x, weight, bias, patch_size, *,
                        compute_dtype=jnp.bfloat16, out_dtype=None,
                        out_format="NCTHW"):
    """EVA-ViT PatchEmbed forward (Conv3d k=(1,P,P), stride=(1,P,P), pad=0).

    x:      (B, C, T, H, W)   (PyTorch NCTHW)
    weight: (E, C, 1, P, P)   (Conv3d weight)
    bias:   (E,)

    Returns (B, E, T, Hp, Wp) for out_format="NCTHW" (== nn.Conv3d output), or
    (B, T, Hp, Wp, E) for out_format="NTHWC" (token-major, skips the final
    transpose).  out_dtype defaults to x.dtype; note that with a low-precision
    out_dtype (e.g. bf16) the f32 bias-added result is rounded on store.
    """
    B, C, T, H, W = x.shape
    P = patch_size
    assert H % P == 0 and W % P == 0
    Hp, Wp = H // P, W // P
    E = weight.shape[0]
    K = C * P * P
    N = B * T * Hp * Wp
    out_dtype = x.dtype if out_dtype is None else out_dtype

    # ---- glue: unfold (B,C,T,H,W) -> (N, K) with K flattened as (C, ph, pw)
    # to match the Conv3d weight flattening.  XLA fuses the bf16 cast (and the
    # pads below) into this single transpose copy.
    patches = x.reshape(B, C, T, Hp, P, Wp, P)
    patches = patches.transpose(0, 2, 3, 5, 1, 4, 6)          # (B,T,Hp,Wp,C,P,P)
    patches = patches.reshape(N, K).astype(compute_dtype)

    w2d = weight.reshape(E, K).T.astype(compute_dtype)        # (K, E)
    b2d = bias.reshape(1, E).astype(jnp.float32)              # bias stays f32

    in_itemsize = jnp.dtype(compute_dtype).itemsize
    out_itemsize = jnp.dtype(out_dtype).itemsize

    # ---- tiling: lane-dense (128-padded) K/E.
    K_pad = _round_up(K, 128)
    E_pad = _round_up(E, 128)

    # Keep the full projection weight resident in VMEM unless its bf16 block is
    # genuinely large (> 8 MiB); for PatchEmbed (K = C*P^2 <= ~1k, E <= ~2k) the
    # resident path is always taken, so the weight is DMA'd from HBM exactly once.
    if K_pad * E_pad * in_itemsize > (8 << 20):
        tn = 512
        E_pad = _round_up(E_pad, tn)
    else:
        tn = E_pad

    def _footprint(tm_):
        # Double-buffered VMEM working set for one grid step.
        return 2 * (tm_ * K_pad * in_itemsize       # activation row tile
                    + K_pad * tn * in_itemsize      # weight tile
                    + 8 * tn * 4                    # bias tile (sublane-padded)
                    + tm_ * tn * out_itemsize)      # output tile

    VMEM_BUDGET = 36 << 20                          # safe on v5e/v6e/v7x

    tm = 1024                                       # multiple of 256 (MXU-friendly)
    while tm > 256 and _cdiv(N, tm) < 8:            # keep the row grid deep enough
        tm //= 2
    while tm > 256 and _footprint(tm) > VMEM_BUDGET:
        tm //= 2
    N_pad = _round_up(N, tm)

    pad_n, pad_k, pad_e = N_pad - N, K_pad - K, E_pad - E
    if pad_n or pad_k:
        patches = jnp.pad(patches, ((0, pad_n), (0, pad_k)))
    if pad_k or pad_e:
        w2d = jnp.pad(w2d, ((0, pad_k), (0, pad_e)))
    if pad_e:
        b2d = jnp.pad(b2d, ((0, 0), (0, pad_e)))

    # Grid: E-tile axis OUTER (usually extent 1 -> weight loaded once and kept
    # resident), row-tile axis INNER (streams the activations).
    grid = (E_pad // tn, N_pad // tm)

    vmem_limit = min(48 << 20, max(32 << 20, _footprint(tm) + (8 << 20)))

    # NOTE: when grid[0] == 1 the weight/bias index_maps are grid-invariant, so
    # the auto-pipeline DMAs them exactly once.  pl.Buffered(1) on those specs
    # would also drop their second VMEM buffer (~K_pad*tn*2 bytes); left at the
    # default for lowering robustness since the budget above already fits.
    out = pl.pallas_call(
        _patch_embed_kernel,
        out_shape=jax.ShapeDtypeStruct((N_pad, E_pad), out_dtype),
        grid_spec=pltpu.PrefetchScalarGridSpec(
            num_scalar_prefetch=0,
            grid=grid,
            in_specs=[
                pl.BlockSpec((tm, K_pad), lambda j, i: (i, 0)),
                pl.BlockSpec((K_pad, tn), lambda j, i: (0, j)),
                pl.BlockSpec((1, tn), lambda j, i: (0, j)),
            ],
            out_specs=pl.BlockSpec((tm, tn), lambda j, i: (i, j)),
        ),
        compiler_params=pltpu.CompilerParams(
            dimension_semantics=("parallel", "parallel"),
            vmem_limit_bytes=vmem_limit,
        ),
    )(patches, w2d, b2d)

    out = out[:N, :E].reshape(B, T, Hp, Wp, E)
    if out_format == "NTHWC":
        return out                                  # token-major, no transpose
    return out.transpose(0, 4, 1, 2, 3)             # nn.Conv3d layout (B,E,T,Hp,Wp)


def _references(x, weight, bias, P):
    """(bf16-rounded-input, exact-f32) references in (B,T,Hp,Wp,E) layout."""
    B, C, T, H, W = x.shape
    E = weight.shape[0]
    Hp, Wp = H // P, W // P
    p = x.reshape(B, C, T, Hp, P, Wp, P).transpose(0, 2, 3, 5, 1, 4, 6)
    p = p.reshape(B * T * Hp * Wp, C * P * P)
    w2 = weight.reshape(E, -1)
    p_bf = p.astype(jnp.bfloat16).astype(jnp.float32)
    w_bf = w2.astype(jnp.bfloat16).astype(jnp.float32)
    ref_bf = (p_bf @ w_bf.T + bias).reshape(B, T, Hp, Wp, E)
    ref_f32 = (p @ w2.T + bias).reshape(B, T, Hp, Wp, E)
    return ref_bf, ref_f32


if __name__ == "__main__":
    key = jax.random.PRNGKey(0)

    # Case 1: img_size=16, patch_size=4, in_chans=3, embed_dim=128, B=2, T=2.
    B, C, T, H, W = 2, 3, 2, 16, 16
    P, E = 4, 128
    k1, k2, k3, key = jax.random.split(key, 4)
    x = jax.random.normal(k1, (B, C, T, H, W), dtype=jnp.float32)
    weight = jax.random.normal(k2, (E, C, 1, P, P), dtype=jnp.float32) * 0.02
    bias = jax.random.normal(k3, (E,), dtype=jnp.float32) * 0.02

    out = jax.block_until_ready(patch_embed_forward(x, weight, bias, P))
    ref_bf, ref_f32 = _references(x, weight, bias, P)
    ref_bf = ref_bf.transpose(0, 4, 1, 2, 3)        # -> (B,E,T,Hp,Wp)
    ref_f32 = ref_f32.transpose(0, 4, 1, 2, 3)
    assert out.shape == (B, E, T, H // P, W // P), out.shape
    assert jnp.allclose(out, ref_bf, atol=2e-3, rtol=2e-3), \
        float(jnp.max(jnp.abs(out - ref_bf)))
    assert jnp.allclose(out, ref_f32, atol=2e-2, rtol=2e-2), \
        float(jnp.max(jnp.abs(out - ref_f32)))

    # Case 2: unaligned K / E (exercises the padding + slicing paths) and the
    # token-major output format.
    B, C, T, H, W = 1, 3, 1, 8, 8
    P, E = 2, 40
    k1, k2, k3, key = jax.random.split(key, 4)
    x = jax.random.normal(k1, (B, C, T, H, W), dtype=jnp.float32)
    weight = jax.random.normal(k2, (E, C, 1, P, P), dtype=jnp.float32) * 0.02
    bias = jax.random.normal(k3, (E,), dtype=jnp.float32) * 0.02

    out2 = jax.block_until_ready(
        patch_embed_forward(x, weight, bias, P, out_format="NTHWC"))
    ref_bf2, ref_f322 = _references(x, weight, bias, P)
    assert out2.shape == (B, T, H // P, W // P, E), out2.shape
    assert jnp.allclose(out2, ref_bf2, atol=2e-3, rtol=2e-3), \
        float(jnp.max(jnp.abs(out2 - ref_bf2)))
    assert jnp.allclose(out2, ref_f322, atol=2e-2, rtol=2e-2), \
        float(jnp.max(jnp.abs(out2 - ref_f322)))

    print("KERNEL_OK")
</pallas_src>

<mosaic_0001>
module attributes {stable_mosaic.version = 11 : i64} {
  func.func @_patch_embed_kernel(%arg0: i32, %arg1: i32, %arg2: memref<256x128xbf16, #tpu.memory_space<vmem>>, %arg3: memref<128x128xbf16, #tpu.memory_space<vmem>>, %arg4: memref<1x128xf32, #tpu.memory_space<vmem>>, %arg5: memref<256x128xf32, #tpu.memory_space<vmem>>) attributes {dimension_semantics = [#tpu.dimension_semantics<parallel>, #tpu.dimension_semantics<parallel>], iteration_bounds = array<i64: 1, 1>, scalar_prefetch = 0 : i64, scratch_operands = 0 : i64, tpu.core_type = #tpu.core_type<tc>, window_params = [{transform_indices = @transform_0, window_bounds = array<i64: 256, 128>}, {transform_indices = @transform_1, window_bounds = array<i64: 128, 128>}, {transform_indices = @transform_2, window_bounds = array<i64: 1, 128>}, {transform_indices = @transform_3, window_bounds = array<i64: 256, 128>}]} {
    %c0 = arith.constant 0 : index
    %c0_0 = arith.constant 0 : index
    %0 = vector.load %arg2[%c0, %c0_0] : memref<256x128xbf16, #tpu.memory_space<vmem>>, vector<256x128xbf16>
    %c0_1 = arith.constant 0 : index
    %c0_2 = arith.constant 0 : index
    %1 = vector.load %arg3[%c0_1, %c0_2] : memref<128x128xbf16, #tpu.memory_space<vmem>>, vector<128x128xbf16>
    %cst = arith.constant dense<0.000000e+00> : vector<256x128xf32>
    %2 = tpu.matmul %0, %1, %cst {dimension_numbers = #tpu.dot_dimension_numbers<[1], [0], [0], [1], [0, 0, 1, 1], [], []>} : vector<256x128xbf16>, vector<128x128xbf16>, vector<256x128xf32> -> vector<256x128xf32>
    %c0_3 = arith.constant 0 : index
    %c0_4 = arith.constant 0 : index
    %3 = vector.load %arg4[%c0_3, %c0_4] : memref<1x128xf32, #tpu.memory_space<vmem>>, vector<1x128xf32>
    %4 = vector.broadcast %3 : vector<1x128xf32> to vector<256x128xf32>
    %5 = arith.addf %2, %4 : vector<256x128xf32>
    %c0_5 = arith.constant 0 : index
    %c0_6 = arith.constant 0 : index
    %6 = vector.load %arg5[%c0_5, %c0_6] : memref<256x128xf32, #tpu.memory_space<vmem>>, vector<256x128xf32>
    tpu.vector_store %arg5[%c0_5, %c0_6], %5 {strides = array<i32>} : memref<256x128xf32, #tpu.memory_space<vmem>>, vector<256x128xf32>,
    return
  }
  func.func @transform_0(%arg0: i32, %arg1: i32) -> (i32, i32) {
    %c0_i32 = arith.constant 0 : i32
    %c0_i32_0 = arith.constant 0 : i32
    return %arg1, %c0_i32 : i32, i32
  }
  func.func @transform_1(%arg0: i32, %arg1: i32) -> (i32, i32) {
    %c0_i32 = arith.constant 0 : i32
    %c0_i32_0 = arith.constant 0 : i32
    return %c0_i32, %arg0 : i32, i32
  }
  func.func @transform_2(%arg0: i32, %arg1: i32) -> (i32, i32) {
    %c0_i32 = arith.constant 0 : i32
    %c0_i32_0 = arith.constant 0 : i32
    return %c0_i32, %arg0 : i32, i32
  }
  func.func @transform_3(%arg0: i32, %arg1: i32) -> (i32, i32) {
    %c0_i32 = arith.constant 0 : i32
    return %arg1, %arg0 : i32, i32
  }
}

</mosaic_0001>

<llo_original>
// kernel: tpu_custom_call.1
$region0: #{tpu_custom_call.1}
  #allocation0 [shape = 'u32[]', space=smem, size = 0x4, offset = 0x4, fixed_abs, tag = 'smem constant byte address 0x4 - core index']
  #allocation1 [shape = 'u32[144,128]{1,0:T(1,128)}', space=vmem, size = 0x12000, scoped, tag = 'internal scratch']
  %s0 = inlined_call_operand.hbm [shape: bf16[256,128], index: 0, kind: input, shape index: {}]
  %s1 = inlined_call_operand.hbm [shape: bf16[128,128], index: 1, kind: input, shape index: {}]
  %s2 = inlined_call_operand.vmem [shape: f32[1,128], index: 2, kind: input, shape index: {}]
  %s3 = inlined_call_operand.hbm [shape: f32[256,128], index: 3, kind: output, shape index: {}]
  %s4 = sld [smem:[#allocation0]]
  $region30: #{tpu_custom_call.1} parent=0
    _
  %s6 = ssub.s32 1, %s4
  %s7 = scalar_select 0, %s6, %s4
  $region1: #{tpu_custom_call.1} parent=0
    #allocation2 [shape = 'u8[65536]{0}', space=vmem, size = 0x10000, scoped, tag = 'input window, operand 0, single buffered']
    #allocation3 [shape = 's32[1]{0}', space=sflag, size = 0x4, scoped, tag = 'scoped memory for tpu_custom_call.1']
    #allocation4 [shape = 's32[1]{0}', space=sflag, size = 0x4, scoped, tag = 'scoped memory for tpu_custom_call.1']
    #allocation5 [shape = 'u8[32768]{0}', space=vmem, size = 0x8000, scoped, tag = 'input window, operand 1, single buffered']
    #allocation6 [shape = 's32[1]{0}', space=sflag, size = 0x4, scoped, tag = 'scoped memory for tpu_custom_call.1']
    #allocation7 [shape = 'u8[131072]{0}', space=vmem, size = 0x20000, scoped, tag = 'output window, operand 0, single buffered']
    %8 = vsyncpa [#allocation3], 0
    %9 = vsyncpa [#allocation6], 0
    %10 = vsyncpa [#allocation4], 0
    // Predicated region
    $region2: #{tpu_custom_call.1} parent=1 // pred_check
      _
    $region3: #{tpu_custom_call.1} parent=1 // pred_check_branch
      %12 = sbr.rel (0) target = $region5
    $region4: #{tpu_custom_call.1} parent=1 // pred_region
      %s14 = ssub.s32 2048, 2048
      %15 = vsyncadd [#allocation3], %s14
      %s16 = sshll.u32 [#allocation2], 4
      %s17 = int_to_ptr.vmem [resolvable:$true] %s16
      %22 = dma.hbm_to_vmem [thread:$0]  %s0, 2048, %s17, [#allocation3], 64, 64, 4
    $region5: #{tpu_custom_call.1} parent=1 // pred_fallthru
      _
    // Predicated region
    $region6: #{tpu_custom_call.1} parent=1 // pred_check
      _
    $region7: #{tpu_custom_call.1} parent=1 // pred_check_branch
      %24 = sbr.rel (0) target = $region9
    $region8: #{tpu_custom_call.1} parent=1 // pred_region
      %s26 = ssub.s32 1024, 1024
      %27 = vsyncadd [#allocation6], %s26
      %s28 = sshll.u32 [#allocation5], 4
      %s29 = int_to_ptr.vmem [resolvable:$true] %s28
      %34 = dma.hbm_to_vmem [thread:$0]  %s1, 1024, %s29, [#allocation6], 64, 64, 4
    $region9: #{tpu_custom_call.1} parent=1 // pred_fallthru
      _
    // Predicated region
    $region10: #{tpu_custom_call.1} parent=1 // pred_check
      _
    $region11: #{tpu_custom_call.1} parent=1 // pred_check_branch
      %36 = sbr.rel (0) target = $region13
    $region12: #{tpu_custom_call.1} parent=1 // pred_region
      _
    $region13: #{tpu_custom_call.1} parent=1 // pred_fallthru
      _
    // Predicated region
    $region14: #{tpu_custom_call.1} parent=1 // pred_check
      _
    $region15: #{tpu_custom_call.1} parent=1 // pred_check_branch
      %38 = sbr.rel (0) target = $region17
    $region16: #{tpu_custom_call.1} parent=1 // pred_region
      %39 = dma.done [#allocation3], 2048
    $region17: #{tpu_custom_call.1} parent=1 // pred_fallthru
      _
    // Predicated region
    $region18: #{tpu_custom_call.1} parent=1 // pred_check
      _
    $region19: #{tpu_custom_call.1} parent=1 // pred_check_branch
      %41 = sbr.rel (0) target = $region21
    $region20: #{tpu_custom_call.1} parent=1 // pred_region
      %42 = dma.done [#allocation6], 1024
    $region21: #{tpu_custom_call.1} parent=1 // pred_fallthru
      _
    %v44 = vld [vmem:[#allocation2] sm:$0xf]
    %v45 = vld [vmem:[#allocation2 + $0x4] sm:$0xf]
    %v46 = vld [vmem:[#allocation2 + $0x8] sm:$0xf]
    %v47 = vld [vmem:[#allocation2 + $0xc] sm:$0xf]
    %v48 = vld [vmem:[#allocation2 + $0x10] sm:$0xf]
    %v49 = vld [vmem:[#allocation2 + $0x14] sm:$0xf]
    %v50 = vld [vmem:[#allocation2 + $0x18] sm:$0xf]
    %v51 = vld [vmem:[#allocation2 + $0x1c] sm:$0xf]
    %v52 = vld [vmem:[#allocation2 + $0x20] sm:$0xf]
    %v53 = vld [vmem:[#allocation2 + $0x24] sm:$0xf]
    %v54 = vld [vmem:[#allocation2 + $0x28] sm:$0xf]
    %v55 = vld [vmem:[#allocation2 + $0x2c] sm:$0xf]
    %v56 = vld [vmem:[#allocation2 + $0x30] sm:$0xf]
    %v57 = vld [vmem:[#allocation2 + $0x34] sm:$0xf]
    %v58 = vld [vmem:[#allocation2 + $0x38] sm:$0xf]
    %v59 = vld [vmem:[#allocation2 + $0x3c] sm:$0xf]
    %v60 = vld [vmem:[#allocation2 + $0x40] sm:$0xf]
    %v61 = vld [vmem:[#allocation2 + $0x44] sm:$0xf]
    %v62 = vld [vmem:[#allocation2 + $0x48] sm:$0xf]
    %v63 = vld [vmem:[#allocation2 + $0x4c] sm:$0xf]
    %v64 = vld [vmem:[#allocation2 + $0x50] sm:$0xf]
    %v65 = vld [vmem:[#allocation2 + $0x54] sm:$0xf]
    %v66 = vld [vmem:[#allocation2 + $0x58] sm:$0xf]
    %v67 = vld [vmem:[#allocation2 + $0x5c] sm:$0xf]
    %v68 = vld [vmem:[#allocation2 + $0x60] sm:$0xf]
    %v69 = vld [vmem:[#allocation2 + $0x64] sm:$0xf]
    %v70 = vld [vmem:[#allocation2 + $0x68] sm:$0xf]
    %v71 = vld [vmem:[#allocation2 + $0x6c] sm:$0xf]
    %v72 = vld [vmem:[#allocation2 + $0x70] sm:$0xf]
    %v73 = vld [vmem:[#allocation2 + $0x74] sm:$0xf]
    %v74 = vld [vmem:[#allocation2 + $0x78] sm:$0xf]
    %v75 = vld [vmem:[#allocation2 + $0x7c] sm:$0xf]
    %v76 = vld [vmem:[#allocation5] sm:$0xf]
    %v77 = vld [vmem:[#allocation5 + $0x4] sm:$0xf]
    %v78 = vld [vmem:[#allocation5 + $0x8] sm:$0xf]
    %v79 = vld [vmem:[#allocation5 + $0xc] sm:$0xf]
    %v80 = vld [vmem:[#allocation5 + $0x10] sm:$0xf]
    %v81 = vld [vmem:[#allocation5 + $0x14] sm:$0xf]
    %v82 = vld [vmem:[#allocation5 + $0x18] sm:$0xf]
    %v83 = vld [vmem:[#allocation5 + $0x1c] sm:$0xf]
    %v84 = vld [vmem:[#allocation5 + $0x20] sm:$0xf]
    %v85 = vld [vmem:[#allocation5 + $0x24] sm:$0xf]
    %v86 = vld [vmem:[#allocation5 + $0x28] sm:$0xf]
    %v87 = vld [vmem:[#allocation5 + $0x2c] sm:$0xf]
    %v88 = vld [vmem:[#allocation5 + $0x30] sm:$0xf]
    %v89 = vld [vmem:[#allocation5 + $0x34] sm:$0xf]
    %v90 = vld [vmem:[#allocation5 + $0x38] sm:$0xf]
    %v91 = vld [vmem:[#allocation5 + $0x3c] sm:$0xf]
    %v92 = vld [vmem:[%s2] sm:$0x1]
    %v94 = vlaneseq
    %v95 = vshrl.u32 %v94, 7
    %v96 = vsub.s32 0, %v95
    %v97 = vrot.slane %v92, %v96
    %v131 = vunpack.c.l.b16 %v44
    %v132 = vunpack.c.l.b16 %v45
    %v133 = vunpack.c.l.b16 %v46
    %v134 = vunpack.c.l.b16 %v47
    %v135 = vunpack.c.l.b16 %v48
    %v136 = vunpack.c.l.b16 %v49
    %v137 = vunpack.c.l.b16 %v50
    %v138 = vunpack.c.l.b16 %v51
    %v139 = vunpack.c.l.b16 %v52
    %v140 = vunpack.c.l.b16 %v53
    %v141 = vunpack.c.l.b16 %v54
    %v142 = vunpack.c.l.b16 %v55
    %v143 = vunpack.c.l.b16 %v56
    %v144 = vunpack.c.l.b16 %v57
    %v145 = vunpack.c.l.b16 %v58
    %v146 = vunpack.c.l.b16 %v59
    %v147 = vunpack.c.l.b16 %v60
    %v148 = vunpack.c.l.b16 %v61
    %v149 = vunpack.c.l.b16 %v62
    %v150 = vunpack.c.l.b16 %v63
    %v151 = vunpack.c.l.b16 %v64
    %v152 = vunpack.c.l.b16 %v65
    %v153 = vunpack.c.l.b16 %v66
    %v154 = vunpack.c.l.b16 %v67
    %v155 = vunpack.c.l.b16 %v68
    %v156 = vunpack.c.l.b16 %v69
    %v157 = vunpack.c.l.b16 %v70
    %v158 = vunpack.c.l.b16 %v71
    %v159 = vunpack.c.l.b16 %v72
    %v160 = vunpack.c.l.b16 %v73
    %v161 = vunpack.c.l.b16 %v74
    %v162 = vunpack.c.l.b16 %v75
    %v163 = vpack.c.b16 %v132, %v131
    %v164 = vpack.c.b16 %v134, %v133
    %v165 = vpack.c.b16 %v136, %v135
    %v166 = vpack.c.b16 %v138, %v137
    %v167 = vpack.c.b16 %v140, %v139
    %v168 = vpack.c.b16 %v142, %v141
    %v169 = vpack.c.b16 %v144, %v143
    %v170 = vpack.c.b16 %v146, %v145
    %v171 = vpack.c.b16 %v148, %v147
    %v172 = vpack.c.b16 %v150, %v149
    %v173 = vpack.c.b16 %v152, %v151
    %v174 = vpack.c.b16 %v154, %v153
    %v175 = vpack.c.b16 %v156, %v155
    %v176 = vpack.c.b16 %v158, %v157
    %v177 = vpack.c.b16 %v160, %v159
    %v178 = vpack.c.b16 %v162, %v161
    %v211 = vunpack.c.l.b16 %v76
    %v212 = vunpack.c.l.b16 %v77
    %v213 = vunpack.c.l.b16 %v78
    %v214 = vunpack.c.l.b16 %v79
    %v215 = vunpack.c.l.b16 %v80
    %v216 = vunpack.c.l.b16 %v81
    %v217 = vunpack.c.l.b16 %v82
    %v218 = vunpack.c.l.b16 %v83
    %v219 = vunpack.c.l.b16 %v84
    %v220 = vunpack.c.l.b16 %v85
    %v221 = vunpack.c.l.b16 %v86
    %v222 = vunpack.c.l.b16 %v87
    %v223 = vunpack.c.l.b16 %v88
    %v224 = vunpack.c.l.b16 %v89
    %v225 = vunpack.c.l.b16 %v90
    %v226 = vunpack.c.l.b16 %v91
    %v227 = vpack.c.b16 %v212, %v211
    %v228 = vpack.c.b16 %v214, %v213
    %v229 = vpack.c.b16 %v216, %v215
    %v230 = vpack.c.b16 %v218, %v217
    %v231 = vpack.c.b16 %v220, %v219
    %v232 = vpack.c.b16 %v222, %v221
    %v233 = vpack.c.b16 %v224, %v223
    %v234 = vpack.c.b16 %v226, %v225
    %243 = vmatprep.subr.bf16.mxu0 0
    %244 = vmatpush1.bf16.msra.mxu0 %v227
    %245 = vmatprep.subr.bf16.mxu0 0
    %246 = vmatpush1.bf16.msra.mxu0 %v228
    %247 = vmatprep.subr.bf16.mxu0 0
    %248 = vmatpush1.bf16.msra.mxu0 %v229
    %249 = vmatprep.subr.bf16.mxu0 0
    %250 = vmatpush1.bf16.msra.mxu0 %v230
    %251 = vmatprep.subr.bf16.mxu0 0
    %252 = vmatpush1.bf16.msra.mxu0 %v231
    %253 = vmatprep.subr.bf16.mxu0 0
    %254 = vmatpush1.bf16.msra.mxu0 %v232
    %255 = vmatprep.subr.bf16.mxu0 0
    %256 = vmatpush1.bf16.msra.mxu0 %v233
    %257 = vmatprep.subr.bf16.mxu0 0
    %258 = vmatpush1.bf16.msra.mxu0 %v234
    %259 = vmatprep.subr.bf16.mxu0 0
    %260 = vmatpush1.bf16.msra.mxu0 0
    %261 = vmatprep.subr.bf16.mxu0 0
    %262 = vmatpush1.bf16.msra.mxu0 0
    %263 = vmatprep.subr.bf16.mxu0 0
    %264 = vmatpush1.bf16.msra.mxu0 0
    %265 = vmatprep.subr.bf16.mxu0 0
    %266 = vmatpush1.bf16.msra.mxu0 0
    %267 = vmatprep.subr.bf16.mxu0 0
    %268 = vmatpush1.bf16.msra.mxu0 0
    %269 = vmatprep.subr.bf16.mxu0 0
    %270 = vmatpush1.bf16.msra.mxu0 0
    %271 = vmatprep.subr.bf16.mxu0 0
    %272 = vmatpush1.bf16.msra.mxu0 0
    %273 = vmatprep.subr.bf16.mxu0 0
    %274 = vmatpush1.bf16.msra.mxu0 0
    %275 = vmatprep.mubr.bf16.mxu0 0
    %276 = vmatmul.mubr.bf16.gmra.mrb[0].mxu0 %v163
    %v277 = vpop.f32.mrb[0].mxu0
    %v278 = vadd.f32 %v97, %v277
    %v279 = vpop.f32.mrb[0].mxu0
    %v280 = vpop.f32.mrb[0].mxu0
    %v281 = vadd.f32 %v97, %v280
    %v282 = vpop.f32.mrb[0].mxu0
    %283 = vmatprep.mubr.bf16.mxu0 0
    %284 = vmatmul.mubr.bf16.gmra.mrb[0].mxu0 %v164
    %v285 = vpop.f32.mrb[0].mxu0
    %v286 = vadd.f32 %v97, %v285
    %v287 = vpop.f32.mrb[0].mxu0
    %v288 = vpop.f32.mrb[0].mxu0
    %v289 = vadd.f32 %v97, %v288
    %v290 = vpop.f32.mrb[0].mxu0
    %291 = vmatprep.mubr.bf16.mxu0 0
    %292 = vmatmul.mubr.bf16.gmra.mrb[0].mxu0 %v165
    %v293 = vpop.f32.mrb[0].mxu0
    %v294 = vadd.f32 %v97, %v293
    %v295 = vpop.f32.mrb[0].mxu0
    %v296 = vpop.f32.mrb[0].mxu0
    %v297 = vadd.f32 %v97, %v296
    %v298 = vpop.f32.mrb[0].mxu0
    %299 = vmatprep.mubr.bf16.mxu0 0
    %300 = vmatmul.mubr.bf16.gmra.mrb[0].mxu0 %v166
    %v301 = vpop.f32.mrb[0].mxu0
    %v302 = vadd.f32 %v97, %v301
    %v303 = vpop.f32.mrb[0].mxu0
    %v304 = vpop.f32.mrb[0].mxu0
    %v305 = vadd.f32 %v97, %v304
    %v306 = vpop.f32.mrb[0].mxu0
    %307 = vmatprep.mubr.bf16.mxu0 0
    %308 = vmatmul.mubr.bf16.gmra.mrb[0].mxu0 %v167
    %v309 = vpop.f32.mrb[0].mxu0
    %v310 = vadd.f32 %v97, %v309
    %v311 = vpop.f32.mrb[0].mxu0
    %v312 = vpop.f32.mrb[0].mxu0
    %v313 = vadd.f32 %v97, %v312
    %v314 = vpop.f32.mrb[0].mxu0
    %315 = vmatprep.mubr.bf16.mxu0 0
    %316 = vmatmul.mubr.bf16.gmra.mrb[0].mxu0 %v168
    %v317 = vpop.f32.mrb[0].mxu0
    %v318 = vadd.f32 %v97, %v317
    %v319 = vpop.f32.mrb[0].mxu0
    %v320 = vpop.f32.mrb[0].mxu0
    %v321 = vadd.f32 %v97, %v320
    %v322 = vpop.f32.mrb[0].mxu0
    %323 = vmatprep.mubr.bf16.mxu0 0
    %324 = vmatmul.mubr.bf16.gmra.mrb[0].mxu0 %v169
    %v325 = vpop.f32.mrb[0].mxu0
    %v326 = vadd.f32 %v97, %v325
    %v327 = vpop.f32.mrb[0].mxu0
    %v328 = vpop.f32.mrb[0].mxu0
    %v329 = vadd.f32 %v97, %v328
    %v330 = vpop.f32.mrb[0].mxu0
    %331 = vmatprep.mubr.bf16.mxu0 0
    %332 = vmatmul.mubr.bf16.gmra.mrb[0].mxu0 %v170
    %v333 = vpop.f32.mrb[0].mxu0
    %v334 = vadd.f32 %v97, %v333
    %v335 = vpop.f32.mrb[0].mxu0
    %v336 = vpop.f32.mrb[0].mxu0
    %v337 = vadd.f32 %v97, %v336
    %v338 = vpop.f32.mrb[0].mxu0
    %339 = vmatprep.mubr.bf16.mxu0 0
    %340 = vmatmul.mubr.bf16.gmra.mrb[0].mxu0 %v171
    %v341 = vpop.f32.mrb[0].mxu0
    %v342 = vadd.f32 %v97, %v341
    %v343 = vpop.f32.mrb[0].mxu0
    %v344 = vpop.f32.mrb[0].mxu0
    %v345 = vadd.f32 %v97, %v344
    %v346 = vpop.f32.mrb[0].mxu0
    %347 = vmatprep.mubr.bf16.mxu0 0
    %348 = vmatmul.mubr.bf16.gmra.mrb[0].mxu0 %v172
    %v349 = vpop.f32.mrb[0].mxu0
    %v350 = vadd.f32 %v97, %v349
    %v351 = vpop.f32.mrb[0].mxu0
    %v352 = vpop.f32.mrb[0].mxu0
    %v353 = vadd.f32 %v97, %v352
    %v354 = vpop.f32.mrb[0].mxu0
    %355 = vmatprep.mubr.bf16.mxu0 0
    %356 = vmatmul.mubr.bf16.gmra.mrb[0].mxu0 %v173
    %v357 = vpop.f32.mrb[0].mxu0
    %v358 = vadd.f32 %v97, %v357
    %v359 = vpop.f32.mrb[0].mxu0
    %v360 = vpop.f32.mrb[0].mxu0
    %v361 = vadd.f32 %v97, %v360
    %v362 = vpop.f32.mrb[0].mxu0
    %363 = vmatprep.mubr.bf16.mxu0 0
    %364 = vmatmul.mubr.bf16.gmra.mrb[0].mxu0 %v174
    %v365 = vpop.f32.mrb[0].mxu0
    %v366 = vadd.f32 %v97, %v365
    %v367 = vpop.f32.mrb[0].mxu0
    %v368 = vpop.f32.mrb[0].mxu0
    %v369 = vadd.f32 %v97, %v368
    %v370 = vpop.f32.mrb[0].mxu0
    %371 = vmatprep.mubr.bf16.mxu0 0
    %372 = vmatmul.mubr.bf16.gmra.mrb[0].mxu0 %v175
    %v373 = vpop.f32.mrb[0].mxu0
    %v374 = vadd.f32 %v97, %v373
    %v375 = vpop.f32.mrb[0].mxu0
    %v376 = vpop.f32.mrb[0].mxu0
    %v377 = vadd.f32 %v97, %v376
    %v378 = vpop.f32.mrb[0].mxu0
    %379 = vmatprep.mubr.bf16.mxu0 0
    %380 = vmatmul.mubr.bf16.gmra.mrb[0].mxu0 %v176
    %v381 = vpop.f32.mrb[0].mxu0
    %v382 = vadd.f32 %v97, %v381
    %v383 = vpop.f32.mrb[0].mxu0
    %v384 = vpop.f32.mrb[0].mxu0
    %v385 = vadd.f32 %v97, %v384
    %v386 = vpop.f32.mrb[0].mxu0
    %387 = vmatprep.mubr.bf16.mxu0 0
    %388 = vmatmul.mubr.bf16.gmra.mrb[0].mxu0 %v177
    %v389 = vpop.f32.mrb[0].mxu0
    %v390 = vadd.f32 %v97, %v389
    %v391 = vpop.f32.mrb[0].mxu0
    %v392 = vpop.f32.mrb[0].mxu0
    %v393 = vadd.f32 %v97, %v392
    %v394 = vpop.f32.mrb[0].mxu0
    %395 = vmatprep.mubr.bf16.mxu0 0
    %396 = vmatmul.mubr.bf16.gmra.mrb[0].mxu0 %v178
    %v397 = vpop.f32.mrb[0].mxu0
    %v398 = vadd.f32 %v97, %v397
    %v399 = vpop.f32.mrb[0].mxu0
    %v400 = vpop.f32.mrb[0].mxu0
    %v401 = vadd.f32 %v97, %v400
    %v402 = vpop.f32.mrb[0].mxu0
    %403 = vdwg.mxu0
    %404 = vst [vmem:[#allocation7] sm:$0xff] %v278
    %405 = vst [vmem:[#allocation7 + $0x8] sm:$0xff] %v281
    %406 = vst [vmem:[#allocation7 + $0x10] sm:$0xff] %v286
    %407 = vst [vmem:[#allocation7 + $0x18] sm:$0xff] %v289
    %408 = vst [vmem:[#allocation7 + $0x20] sm:$0xff] %v294
    %409 = vst [vmem:[#allocation7 + $0x28] sm:$0xff] %v297
    %410 = vst [vmem:[#allocation7 + $0x30] sm:$0xff] %v302
    %411 = vst [vmem:[#allocation7 + $0x38] sm:$0xff] %v305
    %412 = vst [vmem:[#allocation7 + $0x40] sm:$0xff] %v310
    %413 = vst [vmem:[#allocation7 + $0x48] sm:$0xff] %v313
    %414 = vst [vmem:[#allocation7 + $0x50] sm:$0xff] %v318
    %415 = vst [vmem:[#allocation7 + $0x58] sm:$0xff] %v321
    %416 = vst [vmem:[#allocation7 + $0x60] sm:$0xff] %v326
    %417 = vst [vmem:[#allocation7 + $0x68] sm:$0xff] %v329
    %418 = vst [vmem:[#allocation7 + $0x70] sm:$0xff] %v334
    %419 = vst [vmem:[#allocation7 + $0x78] sm:$0xff] %v337
    %420 = vst [vmem:[#allocation7 + $0x80] sm:$0xff] %v342
    %421 = vst [vmem:[#allocation7 + $0x88] sm:$0xff] %v345
    %422 = vst [vmem:[#allocation7 + $0x90] sm:$0xff] %v350
    %423 = vst [vmem:[#allocation7 + $0x98] sm:$0xff] %v353
    %424 = vst [vmem:[#allocation7 + $0xa0] sm:$0xff] %v358
    %425 = vst [vmem:[#allocation7 + $0xa8] sm:$0xff] %v361
    %426 = vst [vmem:[#allocation7 + $0xb0] sm:$0xff] %v366
    %427 = vst [vmem:[#allocation7 + $0xb8] sm:$0xff] %v369
    %428 = vst [vmem:[#allocation7 + $0xc0] sm:$0xff] %v374
    %429 = vst [vmem:[#allocation7 + $0xc8] sm:$0xff] %v377
    %430 = vst [vmem:[#allocation7 + $0xd0] sm:$0xff] %v382
    %431 = vst [vmem:[#allocation7 + $0xd8] sm:$0xff] %v385
    %432 = vst [vmem:[#allocation7 + $0xe0] sm:$0xff] %v390
    %433 = vst [vmem:[#allocation7 + $0xe8] sm:$0xff] %v393
    %434 = vst [vmem:[#allocation7 + $0xf0] sm:$0xff] %v398
    %435 = vst [vmem:[#allocation7 + $0xf8] sm:$0xff] %v401
    // Predicated region
    $region22: #{tpu_custom_call.1} parent=1 // pred_check
      _
    $region23: #{tpu_custom_call.1} parent=1 // pred_check_branch
      %437 = sbr.rel (0) target = $region25
    $region24: #{tpu_custom_call.1} parent=1 // pred_region
      %s439 = ssub.s32 4096, 4096
      %440 = vsyncadd [#allocation4], %s439
      %s441 = sshll.u32 [#allocation7], 4
      %s442 = int_to_ptr.vmem [resolvable:$true] %s441
      %447 = dma.vmem_to_hbm [thread:$0]  %s442, 4096, %s3, [#allocation4], 128, 128, 8
    $region25: #{tpu_custom_call.1} parent=1 // pred_fallthru
      _
    // Predicated region
    $region26: #{tpu_custom_call.1} parent=1 // pred_check
      _
    $region27: #{tpu_custom_call.1} parent=1 // pred_check_branch
      %449 = sbr.rel (0) target = $region29
    $region28: #{tpu_custom_call.1} parent=1 // pred_region
      %450 = dma.done [#allocation4], 4096
    $region29: #{tpu_custom_call.1} parent=1 // pred_fallthru
      _
    %451 = vsyncpa [#allocation3], 1
    %452 = vsyncpa [#allocation6], 1
    %453 = vsyncpa [#allocation4], 1

</llo_original>
